<compile_context>
chip_gen: v5e
topology: v5e:2x2
jax: 0.10.0
libtpu: 0.0.40
codegen_flags: <defaults>
</compile_context>

<pallas_src>
import functools
import math

import jax
import jax.numpy as jnp
from jax import lax
from jax.experimental import pallas as pl
from jax.experimental.pallas import tpu as pltpu


def _mha_kernel(x_ref, wqkv_ref, bqkv_ref, wo_ref, bo_ref, out_ref,
                *, num_heads, head_dim, scaling):
    T = x_ref.shape[1]
    E = num_heads * head_dim

    x = x_ref[0]                                                        # [T, E]

    # Fused QKV projection: one wide MXU matmul + bias.
    qkv = jnp.dot(x, wqkv_ref[...],
                  preferred_element_type=jnp.float32) + bqkv_ref[...]   # [T, 3E]

    acc = jnp.zeros((T, E), dtype=jnp.float32)
    for h in range(num_heads):                                          # small, fully unrolled
        lo = h * head_dim
        q_h = qkv[:, lo:lo + head_dim] * scaling                        # [T, d]
        k_h = qkv[:, E + lo:E + lo + head_dim]                          # [T, d]
        v_h = qkv[:, 2 * E + lo:2 * E + lo + head_dim]                  # [T, d]

        # scores = q_h @ k_h^T (contract head dim of both; no explicit transpose)
        s = lax.dot_general(q_h, k_h, (((1,), (1,)), ((), ())),
                            preferred_element_type=jnp.float32)         # [T, T]

        # Numerically stable softmax; reciprocal runs on the (otherwise idle) EUP.
        m = jnp.max(s, axis=-1, keepdims=True)
        e = jnp.exp(s - m)
        p = e * pl.reciprocal(jnp.sum(e, axis=-1, keepdims=True))       # exact recip

        o_h = jnp.dot(p, v_h, preferred_element_type=jnp.float32)       # [T, d]

        # Fold concat-over-heads + out_proj into a per-head accumulate.
        acc = acc + jnp.dot(o_h, wo_ref[lo:lo + head_dim, :],
                            preferred_element_type=jnp.float32)         # [T, E]

    out_ref[0] = (acc + bo_ref[...]).astype(out_ref.dtype)


def graph_attention(hidden_states, wq, bq, wk, bk, wv, bv, wo, bo, *, num_heads):
    """hidden_states: [B,T,E]; w*: [E,E] ((in,out) layout); b*: [E]. Returns [B,T,E]."""
    B, T, E = hidden_states.shape
    assert E % num_heads == 0, "embed_dim must be divisible by num_heads"
    head_dim = E // num_heads
    scaling = head_dim ** -0.5

    # Fuse the three projection weights so the kernel issues one wide matmul.
    wqkv = jnp.concatenate([wq, wk, wv], axis=1)                        # [E, 3E]
    bqkv = jnp.concatenate([bq, bk, bv], axis=0).reshape(1, 3 * E)      # [1, 3E]
    bo2 = bo.reshape(1, E)

    kernel = functools.partial(_mha_kernel, num_heads=num_heads,
                               head_dim=head_dim, scaling=scaling)

    grid_spec = pltpu.PrefetchScalarGridSpec(
        num_scalar_prefetch=0,
        grid=(B,),                                                      # one step per batch
        in_specs=[
            pl.BlockSpec((1, T, E), lambda b: (b, 0, 0)),               # hidden_states
            pl.BlockSpec((E, 3 * E), lambda b: (0, 0)),                 # fused QKV weight (resident)
            pl.BlockSpec((1, 3 * E), lambda b: (0, 0)),                 # fused QKV bias   (resident)
            pl.BlockSpec((E, E), lambda b: (0, 0)),                     # out_proj weight  (resident)
            pl.BlockSpec((1, E), lambda b: (0, 0)),                     # out_proj bias    (resident)
        ],
        out_specs=pl.BlockSpec((1, T, E), lambda b: (b, 0, 0)),
    )

    return pl.pallas_call(
        kernel,
        out_shape=jax.ShapeDtypeStruct((B, T, E), hidden_states.dtype),
        grid_spec=grid_spec,
        compiler_params=pltpu.CompilerParams(
            dimension_semantics=("parallel",),                          # B>=2 keeps both v7x TCs busy
        ),
    )(hidden_states, wqkv, bqkv, wo, bo2)


def graph_attention_ref(x, wq, bq, wk, bk, wv, bv, wo, bo, *, num_heads):
    """Pure-JAX reference of the PyTorch forward (default path)."""
    B, T, E = x.shape
    d = E // num_heads
    scaling = d ** -0.5

    q = (x @ wq + bq) * scaling
    k = x @ wk + bk
    v = x @ wv + bv

    def split(t):
        return t.reshape(B, T, num_heads, d).transpose(0, 2, 1, 3)      # [B,H,T,d]

    qh, kh, vh = split(q), split(k), split(v)
    s = jnp.einsum('bhtd,bhsd->bhts', qh, kh)
    p = jax.nn.softmax(s, axis=-1)
    o = jnp.einsum('bhts,bhsd->bhtd', p, vh)
    o = o.transpose(0, 2, 1, 3).reshape(B, T, E)
    return o @ wo + bo


if __name__ == "__main__":
    # Small shapes consistent with the module: batch=2, seq=8, embed_dim=32, heads=4.
    B, T, E, H = 2, 8, 32, 4

    key = jax.random.PRNGKey(0)
    kx, *kws = jax.random.split(key, 9)

    x = jax.random.normal(kx, (B, T, E), dtype=jnp.float32)

    # Deterministic Linear-style init: uniform(-stdv, stdv), stdv = 1/sqrt(E).
    stdv = 1.0 / math.sqrt(E)

    def mk_w(k):
        return jax.random.uniform(k, (E, E), minval=-stdv, maxval=stdv,
                                  dtype=jnp.float32)

    def mk_b(k):
        return jax.random.uniform(k, (E,), minval=-stdv, maxval=stdv,
                                  dtype=jnp.float32)

    wq, bq = mk_w(kws[0]), mk_b(kws[1])
    wk, bk = mk_w(kws[2]), mk_b(kws[3])
    wv, bv = mk_w(kws[4]), mk_b(kws[5])
    wo, bo = mk_w(kws[6]), mk_b(kws[7])

    out = graph_attention(x, wq, bq, wk, bk, wv, bv, wo, bo, num_heads=H)
    out = jax.block_until_ready(out)

    ref = graph_attention_ref(x, wq, bq, wk, bk, wv, bv, wo, bo, num_heads=H)
    assert out.shape == (B, T, E)
    assert jnp.allclose(out, ref, atol=1e-4, rtol=1e-4), "mismatch vs reference"

    print("KERNEL_OK")
</pallas_src>

<mosaic_0001>
module attributes {stable_mosaic.version = 11 : i64} {
  func.func @_mha_kernel(%arg0: i32, %arg1: memref<1x8x32xf32, #tpu.memory_space<vmem>>, %arg2: memref<32x96xf32, #tpu.memory_space<vmem>>, %arg3: memref<1x96xf32, #tpu.memory_space<vmem>>, %arg4: memref<32x32xf32, #tpu.memory_space<vmem>>, %arg5: memref<1x32xf32, #tpu.memory_space<vmem>>, %arg6: memref<1x8x32xf32, #tpu.memory_space<vmem>>) attributes {dimension_semantics = [#tpu.dimension_semantics<parallel>], iteration_bounds = array<i64: 2>, scalar_prefetch = 0 : i64, scratch_operands = 0 : i64, tpu.core_type = #tpu.core_type<tc>, window_params = [{transform_indices = @transform_0, window_bounds = array<i64: 1, 8, 32>}, {pipeline_mode = #tpu.pipeline_mode<synchronous>, transform_indices = @transform_1, window_bounds = array<i64: 32, 96>}, {pipeline_mode = #tpu.pipeline_mode<synchronous>, transform_indices = @transform_2, window_bounds = array<i64: 1, 96>}, {pipeline_mode = #tpu.pipeline_mode<synchronous>, transform_indices = @transform_3, window_bounds = array<i64: 32, 32>}, {pipeline_mode = #tpu.pipeline_mode<synchronous>, transform_indices = @transform_4, window_bounds = array<i64: 1, 32>}, {transform_indices = @transform_5, window_bounds = array<i64: 1, 8, 32>}]} {
    %c0 = arith.constant 0 : index
    %c0_0 = arith.constant 0 : index
    %c0_1 = arith.constant 0 : index
    %0 = vector.load %arg1[%c0, %c0_0, %c0_1] : memref<1x8x32xf32, #tpu.memory_space<vmem>>, vector<1x8x32xf32>
    %1 = vector.shape_cast %0 : vector<1x8x32xf32> to vector<8x32xf32>
    %c0_2 = arith.constant 0 : index
    %c0_3 = arith.constant 0 : index
    %2 = vector.load %arg2[%c0_2, %c0_3] : memref<32x96xf32, #tpu.memory_space<vmem>>, vector<32x96xf32>
    %cst = arith.constant dense<0.000000e+00> : vector<8x96xf32>
    %3 = tpu.matmul %1, %2, %cst {dimension_numbers = #tpu.dot_dimension_numbers<[1], [0], [0], [1], [0, 0, 1, 1], [], []>} : vector<8x32xf32>, vector<32x96xf32>, vector<8x96xf32> -> vector<8x96xf32>
    %c0_4 = arith.constant 0 : index
    %c0_5 = arith.constant 0 : index
    %4 = vector.load %arg3[%c0_4, %c0_5] : memref<1x96xf32, #tpu.memory_space<vmem>>, vector<1x96xf32>
    %5 = vector.broadcast %4 : vector<1x96xf32> to vector<8x96xf32>
    %6 = arith.addf %3, %5 : vector<8x96xf32>
    %cst_6 = arith.constant 0.000000e+00 : f32
    %7 = vector.broadcast %cst_6 : f32 to vector<8x32xf32>
    %8 = vector.extract_strided_slice %6 {offsets = [0, 0], sizes = [8, 8], strides = [1, 1]} : vector<8x96xf32> to vector<8x8xf32>
    %cst_7 = arith.constant 0.353553385 : f32
    %9 = vector.broadcast %cst_7 : f32 to vector<8x8xf32>
    %10 = arith.mulf %8, %9 : vector<8x8xf32>
    %11 = vector.extract_strided_slice %6 {offsets = [0, 32], sizes = [8, 8], strides = [1, 1]} : vector<8x96xf32> to vector<8x8xf32>
    %12 = vector.extract_strided_slice %6 {offsets = [0, 64], sizes = [8, 8], strides = [1, 1]} : vector<8x96xf32> to vector<8x8xf32>
    %cst_8 = arith.constant dense<0.000000e+00> : vector<8x8xf32>
    %13 = tpu.matmul %10, %11, %cst_8 {dimension_numbers = #tpu.dot_dimension_numbers<[1], [1], [0], [0], [0, 0, 1, 0], [], []>} : vector<8x8xf32>, vector<8x8xf32>, vector<8x8xf32> -> vector<8x8xf32>
    %cst_9 = arith.constant dense<0xFF800000> : vector<8xf32>
    %14 = vector.multi_reduction <maximumf>, %13, %cst_9 [1] : vector<8x8xf32> to vector<8xf32>
    %15 = vector.shape_cast %14 : vector<8xf32> to vector<8x1xf32>
    %16 = vector.broadcast %15 : vector<8x1xf32> to vector<8x8xf32>
    %17 = arith.subf %13, %16 : vector<8x8xf32>
    %18 = math.exp %17 : vector<8x8xf32>
    %cst_10 = arith.constant dense<0.000000e+00> : vector<8xf32>
    %19 = vector.multi_reduction <add>, %18, %cst_10 [1] : vector<8x8xf32> to vector<8xf32>
    %20 = vector.shape_cast %19 : vector<8xf32> to vector<8x1xf32>
    %21 = tpu.reciprocal %20 : vector<8x1xf32> -> vector<8x1xf32>
    %22 = vector.broadcast %21 : vector<8x1xf32> to vector<8x8xf32>
    %23 = arith.mulf %18, %22 : vector<8x8xf32>
    %cst_11 = arith.constant dense<0.000000e+00> : vector<8x8xf32>
    %24 = tpu.matmul %23, %12, %cst_11 {dimension_numbers = #tpu.dot_dimension_numbers<[1], [0], [0], [1], [0, 0, 1, 1], [], []>} : vector<8x8xf32>, vector<8x8xf32>, vector<8x8xf32> -> vector<8x8xf32>
    %c0_12 = arith.constant 0 : index
    %c0_13 = arith.constant 0 : index
    %25 = vector.load %arg4[%c0_12, %c0_13] : memref<32x32xf32, #tpu.memory_space<vmem>>, vector<8x32xf32>
    %cst_14 = arith.constant dense<0.000000e+00> : vector<8x32xf32>
    %26 = tpu.matmul %24, %25, %cst_14 {dimension_numbers = #tpu.dot_dimension_numbers<[1], [0], [0], [1], [0, 0, 1, 1], [], []>} : vector<8x8xf32>, vector<8x32xf32>, vector<8x32xf32> -> vector<8x32xf32>
    %27 = arith.addf %7, %26 : vector<8x32xf32>
    %28 = vector.extract_strided_slice %6 {offsets = [0, 8], sizes = [8, 8], strides = [1, 1]} : vector<8x96xf32> to vector<8x8xf32>
    %cst_15 = arith.constant 0.353553385 : f32
    %29 = vector.broadcast %cst_15 : f32 to vector<8x8xf32>
    %30 = arith.mulf %28, %29 : vector<8x8xf32>
    %31 = vector.extract_strided_slice %6 {offsets = [0, 40], sizes = [8, 8], strides = [1, 1]} : vector<8x96xf32> to vector<8x8xf32>
    %32 = vector.extract_strided_slice %6 {offsets = [0, 72], sizes = [8, 8], strides = [1, 1]} : vector<8x96xf32> to vector<8x8xf32>
    %cst_16 = arith.constant dense<0.000000e+00> : vector<8x8xf32>
    %33 = tpu.matmul %30, %31, %cst_16 {dimension_numbers = #tpu.dot_dimension_numbers<[1], [1], [0], [0], [0, 0, 1, 0], [], []>} : vector<8x8xf32>, vector<8x8xf32>, vector<8x8xf32> -> vector<8x8xf32>
    %cst_17 = arith.constant dense<0xFF800000> : vector<8xf32>
    %34 = vector.multi_reduction <maximumf>, %33, %cst_17 [1] : vector<8x8xf32> to vector<8xf32>
    %35 = vector.shape_cast %34 : vector<8xf32> to vector<8x1xf32>
    %36 = vector.broadcast %35 : vector<8x1xf32> to vector<8x8xf32>
    %37 = arith.subf %33, %36 : vector<8x8xf32>
    %38 = math.exp %37 : vector<8x8xf32>
    %cst_18 = arith.constant dense<0.000000e+00> : vector<8xf32>
    %39 = vector.multi_reduction <add>, %38, %cst_18 [1] : vector<8x8xf32> to vector<8xf32>
    %40 = vector.shape_cast %39 : vector<8xf32> to vector<8x1xf32>
    %41 = tpu.reciprocal %40 : vector<8x1xf32> -> vector<8x1xf32>
    %42 = vector.broadcast %41 : vector<8x1xf32> to vector<8x8xf32>
    %43 = arith.mulf %38, %42 : vector<8x8xf32>
    %cst_19 = arith.constant dense<0.000000e+00> : vector<8x8xf32>
    %44 = tpu.matmul %43, %32, %cst_19 {dimension_numbers = #tpu.dot_dimension_numbers<[1], [0], [0], [1], [0, 0, 1, 1], [], []>} : vector<8x8xf32>, vector<8x8xf32>, vector<8x8xf32> -> vector<8x8xf32>
    %c8 = arith.constant 8 : index
    %c0_20 = arith.constant 0 : index
    %45 = vector.load %arg4[%c8, %c0_20] : memref<32x32xf32, #tpu.memory_space<vmem>>, vector<8x32xf32>
    %cst_21 = arith.constant dense<0.000000e+00> : vector<8x32xf32>
    %46 = tpu.matmul %44, %45, %cst_21 {dimension_numbers = #tpu.dot_dimension_numbers<[1], [0], [0], [1], [0, 0, 1, 1], [], []>} : vector<8x8xf32>, vector<8x32xf32>, vector<8x32xf32> -> vector<8x32xf32>
    %47 = arith.addf %27, %46 : vector<8x32xf32>
    %48 = vector.extract_strided_slice %6 {offsets = [0, 16], sizes = [8, 8], strides = [1, 1]} : vector<8x96xf32> to vector<8x8xf32>
    %cst_22 = arith.constant 0.353553385 : f32
    %49 = vector.broadcast %cst_22 : f32 to vector<8x8xf32>
    %50 = arith.mulf %48, %49 : vector<8x8xf32>
    %51 = vector.extract_strided_slice %6 {offsets = [0, 48], sizes = [8, 8], strides = [1, 1]} : vector<8x96xf32> to vector<8x8xf32>
    %52 = vector.extract_strided_slice %6 {offsets = [0, 80], sizes = [8, 8], strides = [1, 1]} : vector<8x96xf32> to vector<8x8xf32>
    %cst_23 = arith.constant dense<0.000000e+00> : vector<8x8xf32>
    %53 = tpu.matmul %50, %51, %cst_23 {dimension_numbers = #tpu.dot_dimension_numbers<[1], [1], [0], [0], [0, 0, 1, 0], [], []>} : vector<8x8xf32>, vector<8x8xf32>, vector<8x8xf32> -> vector<8x8xf32>
    %cst_24 = arith.constant dense<0xFF800000> : vector<8xf32>
    %54 = vector.multi_reduction <maximumf>, %53, %cst_24 [1] : vector<8x8xf32> to vector<8xf32>
    %55 = vector.shape_cast %54 : vector<8xf32> to vector<8x1xf32>
    %56 = vector.broadcast %55 : vector<8x1xf32> to vector<8x8xf32>
    %57 = arith.subf %53, %56 : vector<8x8xf32>
    %58 = math.exp %57 : vector<8x8xf32>
    %cst_25 = arith.constant dense<0.000000e+00> : vector<8xf32>
    %59 = vector.multi_reduction <add>, %58, %cst_25 [1] : vector<8x8xf32> to vector<8xf32>
    %60 = vector.shape_cast %59 : vector<8xf32> to vector<8x1xf32>
    %61 = tpu.reciprocal %60 : vector<8x1xf32> -> vector<8x1xf32>
    %62 = vector.broadcast %61 : vector<8x1xf32> to vector<8x8xf32>
    %63 = arith.mulf %58, %62 : vector<8x8xf32>
    %cst_26 = arith.constant dense<0.000000e+00> : vector<8x8xf32>
    %64 = tpu.matmul %63, %52, %cst_26 {dimension_numbers = #tpu.dot_dimension_numbers<[1], [0], [0], [1], [0, 0, 1, 1], [], []>} : vector<8x8xf32>, vector<8x8xf32>, vector<8x8xf32> -> vector<8x8xf32>
    %c16 = arith.constant 16 : index
    %c0_27 = arith.constant 0 : index
    %65 = vector.load %arg4[%c16, %c0_27] : memref<32x32xf32, #tpu.memory_space<vmem>>, vector<8x32xf32>
    %cst_28 = arith.constant dense<0.000000e+00> : vector<8x32xf32>
    %66 = tpu.matmul %64, %65, %cst_28 {dimension_numbers = #tpu.dot_dimension_numbers<[1], [0], [0], [1], [0, 0, 1, 1], [], []>} : vector<8x8xf32>, vector<8x32xf32>, vector<8x32xf32> -> vector<8x32xf32>
    %67 = arith.addf %47, %66 : vector<8x32xf32>
    %68 = vector.extract_strided_slice %6 {offsets = [0, 24], sizes = [8, 8], strides = [1, 1]} : vector<8x96xf32> to vector<8x8xf32>
    %cst_29 = arith.constant 0.353553385 : f32
    %69 = vector.broadcast %cst_29 : f32 to vector<8x8xf32>
    %70 = arith.mulf %68, %69 : vector<8x8xf32>
    %71 = vector.extract_strided_slice %6 {offsets = [0, 56], sizes = [8, 8], strides = [1, 1]} : vector<8x96xf32> to vector<8x8xf32>
    %72 = vector.extract_strided_slice %6 {offsets = [0, 88], sizes = [8, 8], strides = [1, 1]} : vector<8x96xf32> to vector<8x8xf32>
    %cst_30 = arith.constant dense<0.000000e+00> : vector<8x8xf32>
    %73 = tpu.matmul %70, %71, %cst_30 {dimension_numbers = #tpu.dot_dimension_numbers<[1], [1], [0], [0], [0, 0, 1, 0], [], []>} : vector<8x8xf32>, vector<8x8xf32>, vector<8x8xf32> -> vector<8x8xf32>
    %cst_31 = arith.constant dense<0xFF800000> : vector<8xf32>
    %74 = vector.multi_reduction <maximumf>, %73, %cst_31 [1] : vector<8x8xf32> to vector<8xf32>
    %75 = vector.shape_cast %74 : vector<8xf32> to vector<8x1xf32>
    %76 = vector.broadcast %75 : vector<8x1xf32> to vector<8x8xf32>
    %77 = arith.subf %73, %76 : vector<8x8xf32>
    %78 = math.exp %77 : vector<8x8xf32>
    %cst_32 = arith.constant dense<0.000000e+00> : vector<8xf32>
    %79 = vector.multi_reduction <add>, %78, %cst_32 [1] : vector<8x8xf32> to vector<8xf32>
    %80 = vector.shape_cast %79 : vector<8xf32> to vector<8x1xf32>
    %81 = tpu.reciprocal %80 : vector<8x1xf32> -> vector<8x1xf32>
    %82 = vector.broadcast %81 : vector<8x1xf32> to vector<8x8xf32>
    %83 = arith.mulf %78, %82 : vector<8x8xf32>
    %cst_33 = arith.constant dense<0.000000e+00> : vector<8x8xf32>
    %84 = tpu.matmul %83, %72, %cst_33 {dimension_numbers = #tpu.dot_dimension_numbers<[1], [0], [0], [1], [0, 0, 1, 1], [], []>} : vector<8x8xf32>, vector<8x8xf32>, vector<8x8xf32> -> vector<8x8xf32>
    %c24 = arith.constant 24 : index
    %c0_34 = arith.constant 0 : index
    %85 = vector.load %arg4[%c24, %c0_34] : memref<32x32xf32, #tpu.memory_space<vmem>>, vector<8x32xf32>
    %cst_35 = arith.constant dense<0.000000e+00> : vector<8x32xf32>
    %86 = tpu.matmul %84, %85, %cst_35 {dimension_numbers = #tpu.dot_dimension_numbers<[1], [0], [0], [1], [0, 0, 1, 1], [], []>} : vector<8x8xf32>, vector<8x32xf32>, vector<8x32xf32> -> vector<8x32xf32>
    %87 = arith.addf %67, %86 : vector<8x32xf32>
    %c0_36 = arith.constant 0 : index
    %c0_37 = arith.constant 0 : index
    %88 = vector.load %arg5[%c0_36, %c0_37] : memref<1x32xf32, #tpu.memory_space<vmem>>, vector<1x32xf32>
    %89 = vector.broadcast %88 : vector<1x32xf32> to vector<8x32xf32>
    %90 = arith.addf %87, %89 : vector<8x32xf32>
    %c0_38 = arith.constant 0 : index
    %c0_39 = arith.constant 0 : index
    %c0_40 = arith.constant 0 : index
    %91 = vector.load %arg6[%c0_38, %c0_39, %c0_40] : memref<1x8x32xf32, #tpu.memory_space<vmem>>, vector<1x8x32xf32>
    %92 = vector.shape_cast %91 : vector<1x8x32xf32> to vector<8x32xf32>
    %93 = vector.shape_cast %90 : vector<8x32xf32> to vector<1x8x32xf32>
    tpu.vector_store %arg6[%c0_38, %c0_39, %c0_40], %93 {strides = array<i32>} : memref<1x8x32xf32, #tpu.memory_space<vmem>>, vector<1x8x32xf32>,
    return
  }
  func.func @transform_0(%arg0: i32) -> (i32, i32, i32) {
    %c0_i32 = arith.constant 0 : i32
    %c0_i32_0 = arith.constant 0 : i32
    %c0_i32_1 = arith.constant 0 : i32
    return %arg0, %c0_i32, %c0_i32_0 : i32, i32, i32
  }
  func.func @transform_1(%arg0: i32) -> (i32, i32) {
    %c0_i32 = arith.constant 0 : i32
    %c0_i32_0 = arith.constant 0 : i32
    %c0_i32_1 = arith.constant 0 : i32
    return %c0_i32, %c0_i32_0 : i32, i32
  }
  func.func @transform_2(%arg0: i32) -> (i32, i32) {
    %c0_i32 = arith.constant 0 : i32
    %c0_i32_0 = arith.constant 0 : i32
    %c0_i32_1 = arith.constant 0 : i32
    return %c0_i32, %c0_i32_0 : i32, i32
  }
  func.func @transform_3(%arg0: i32) -> (i32, i32) {
    %c0_i32 = arith.constant 0 : i32
    %c0_i32_0 = arith.constant 0 : i32
    %c0_i32_1 = arith.constant 0 : i32
    return %c0_i32, %c0_i32_0 : i32, i32
  }
  func.func @transform_4(%arg0: i32) -> (i32, i32) {
    %c0_i32 = arith.constant 0 : i32
    %c0_i32_0 = arith.constant 0 : i32
    %c0_i32_1 = arith.constant 0 : i32
    return %c0_i32, %c0_i32_0 : i32, i32
  }
  func.func @transform_5(%arg0: i32) -> (i32, i32, i32) {
    %c0_i32 = arith.constant 0 : i32
    %c0_i32_0 = arith.constant 0 : i32
    %c0_i32_1 = arith.constant 0 : i32
    return %arg0, %c0_i32, %c0_i32_0 : i32, i32, i32
  }
}

</mosaic_0001>

<llo_original>
// kernel: tpu_custom_call.1
$region0: #{tpu_custom_call.1}
  #allocation0 [shape = 'u32[]', space=smem, size = 0x4, offset = 0x4, fixed_abs, tag = 'smem constant byte address 0x4 - core index']
  #allocation1 [shape = 'u32[72,128]{1,0:T(1,128)}', space=vmem, size = 0x9000, scoped, tag = 'internal scratch']
  %s0 = inlined_call_operand.hbm [shape: f32[2,8,32], index: 0, kind: input, shape index: {}]
  %s1 = inlined_call_operand.hbm [shape: f32[32,96], index: 1, kind: input, shape index: {}]
  %s2 = inlined_call_operand.vmem [shape: f32[1,96], index: 2, kind: input, shape index: {}]
  %s3 = inlined_call_operand.hbm [shape: f32[32,32], index: 3, kind: input, shape index: {}]
  %s4 = inlined_call_operand.vmem [shape: f32[1,32], index: 4, kind: input, shape index: {}]
  %s5 = inlined_call_operand.hbm [shape: f32[2,8,32], index: 5, kind: output, shape index: {}]
  %s6 = sld [smem:[#allocation0]]
  $region65: #{tpu_custom_call.1} parent=0
    _
  %s8 = ssub.s32 1, %s6
  %s9 = scalar_select 0, %s8, %s6
  $region1: #{tpu_custom_call.1} parent=0
    #allocation2 [shape = 'u8[8192]{0}', space=vmem, size = 0x2000, scoped, tag = 'input window, operand 0']
    #allocation3 [shape = 's32[2]{0}', space=sflag, size = 0x8, scoped, tag = 'scoped memory for tpu_custom_call.1']
    #allocation4 [shape = 's32[2]{0}', space=sflag, size = 0x8, scoped, tag = 'scoped memory for tpu_custom_call.1']
    #allocation5 [shape = 'u8[16384]{0}', space=vmem, size = 0x4000, scoped, tag = 'input window, operand 1, single buffered']
    #allocation6 [shape = 's32[1]{0}', space=sflag, size = 0x4, scoped, tag = 'scoped memory for tpu_custom_call.1']
    #allocation7 [shape = 'u8[16384]{0}', space=vmem, size = 0x4000, scoped, tag = 'input window, operand 3, single buffered']
    #allocation8 [shape = 'u8[8192]{0}', space=vmem, size = 0x2000, scoped, tag = 'output window, operand 0']
    %10 = vsyncpa [#allocation3], 0
    %s11 = scalar_lea.sflag [#allocation3], 1
    %12 = vsyncpa %s11, 0
    %13 = vsyncpa [#allocation6], 0
    %14 = vsyncpa [#allocation4], 0
    %s15 = scalar_lea.sflag [#allocation4], 1
    %16 = vsyncpa %s15, 0
    loop: start=0, step=1, limit=4
    $region2: #{tpu_custom_call.1} parent=1 // loop_pre_header
      _
    $region3: #{tpu_custom_call.1} parent=1 // loop_header
      %s18 = sphi 0, %s22
      %p19 = scmp.ge.s32.totalorder %s18, 4
      %s28 = sphi 0, %s30
      %s31 = sphi 0, %s28
      %s32 = sphi 0, %s31
      %s48 = sphi 0, %s32
      %s52 = sphi 0, %s52
      %s54 = sphi 0, %s52
      %s55 = sphi 0, %s54
      %s69 = sphi 0, %s55
      %s73 = sphi 0, %s73
      %s75 = sphi 0, %s73
      %s76 = sphi 0, %s75
      %s90 = sphi 0, %s76
      %s94 = sphi 0, %s94
      %s96 = sphi 0, %s94
      %s97 = sphi 0, %s96
      %s111 = sphi 0, %s97
      %s115 = sphi 0, %s115
      %s117 = sphi 0, %s115
      %s118 = sphi 0, %s117
      %s132 = sphi 0, %s118
      %s138 = sphi 0, %s140
      %s141 = sphi 0, %s138
      %s142 = sphi 0, %s141
      %s158 = sphi 0, %s142
    $region4: #{tpu_custom_call.1} parent=1 // loop_header_branch
      %21 = sbr.rel (%p19) target = $region8
    $region5: #{tpu_custom_call.1} parent=1 // loop_body
      %s23 = ssub.s32 %s18, 1
      %s24 = ssub.s32 %s18, 2
      %s25 = sadd.s32 %s18, 1
      %s26 = ssub.s32 %s18, %s25
      %p27 = scmp.eq.s32.totalorder %s26, 0
      %s29 = sadd.s32 %s28, 1
      %s30 = scalar_select %p27, %s28, %s29
      %p33 = pneg %p27
      %p34 = scmp.eq.s32.totalorder %s18, 1
      %p35 = por %p33, %p34
      %p36 = scmp.ne.s32.totalorder %s28, %s31
      %p37 = scmp.eq.s32.totalorder %s18, 0
      %p38 = por %p36, %p37
      %p39 = scmp.ne.s32.totalorder %s28, %s31
      %p40 = scmp.eq.s32.totalorder %s23, 1
      %p41 = por %p39, %p40
      %p42 = scmp.ne.s32.totalorder %s31, %s32
      %p43 = scmp.eq.s32.totalorder %s23, 0
      %p44 = por %p42, %p43
      %p45 = scmp.ne.s32.totalorder %s31, %s32
      %p46 = scmp.eq.s32.totalorder %s24, 1
      %p47 = por %p45, %p46
      %p49 = scmp.ne.s32.totalorder %s32, %s48
      %p50 = scmp.eq.s32.totalorder %s24, 0
      %p51 = por %p49, %p50
      %s53 = sadd.s32 %s52, 1
      %p56 = scmp.eq.s32.totalorder %s18, 1
      %p57 = scmp.ne.s32.totalorder %s52, %s54
      %p58 = scmp.eq.s32.totalorder %s18, 0
      %p59 = por %p57, %p58
      %p60 = scmp.ne.s32.totalorder %s52, %s54
      %p61 = scmp.eq.s32.totalorder %s23, 1
      %p62 = por %p60, %p61
      %p63 = scmp.ne.s32.totalorder %s54, %s55
      %p64 = scmp.eq.s32.totalorder %s23, 0
      %p65 = por %p63, %p64
      %p66 = scmp.ne.s32.totalorder %s54, %s55
      %p67 = scmp.eq.s32.totalorder %s24, 1
      %p68 = por %p66, %p67
      %p70 = scmp.ne.s32.totalorder %s55, %s69
      %p71 = scmp.eq.s32.totalorder %s24, 0
      %p72 = por %p70, %p71
      %s74 = sadd.s32 %s73, 1
      %p77 = scmp.eq.s32.totalorder %s18, 1
      %p78 = scmp.ne.s32.totalorder %s73, %s75
      %p79 = scmp.eq.s32.totalorder %s18, 0
      %p80 = por %p78, %p79
      %p81 = scmp.ne.s32.totalorder %s73, %s75
      %p82 = scmp.eq.s32.totalorder %s23, 1
      %p83 = por %p81, %p82
      %p84 = scmp.ne.s32.totalorder %s75, %s76
      %p85 = scmp.eq.s32.totalorder %s23, 0
      %p86 = por %p84, %p85
      %p87 = scmp.ne.s32.totalorder %s75, %s76
      %p88 = scmp.eq.s32.totalorder %s24, 1
      %p89 = por %p87, %p88
      %p91 = scmp.ne.s32.totalorder %s76, %s90
      %p92 = scmp.eq.s32.totalorder %s24, 0
      %p93 = por %p91, %p92
      %s95 = sadd.s32 %s94, 1
      %p98 = scmp.eq.s32.totalorder %s18, 1
      %p99 = scmp.ne.s32.totalorder %s94, %s96
      %p100 = scmp.eq.s32.totalorder %s18, 0
      %p101 = por %p99, %p100
      %p102 = scmp.ne.s32.totalorder %s94, %s96
      %p103 = scmp.eq.s32.totalorder %s23, 1
      %p104 = por %p102, %p103
      %p105 = scmp.ne.s32.totalorder %s96, %s97
      %p106 = scmp.eq.s32.totalorder %s23, 0
      %p107 = por %p105, %p106
      %p108 = scmp.ne.s32.totalorder %s96, %s97
      %p109 = scmp.eq.s32.totalorder %s24, 1
      %p110 = por %p108, %p109
      %p112 = scmp.ne.s32.totalorder %s97, %s111
      %p113 = scmp.eq.s32.totalorder %s24, 0
      %p114 = por %p112, %p113
      %s116 = sadd.s32 %s115, 1
      %p119 = scmp.eq.s32.totalorder %s18, 1
      %p120 = scmp.ne.s32.totalorder %s115, %s117
      %p121 = scmp.eq.s32.totalorder %s18, 0
      %p122 = por %p120, %p121
      %p123 = scmp.ne.s32.totalorder %s115, %s117
      %p124 = scmp.eq.s32.totalorder %s23, 1
      %p125 = por %p123, %p124
      %p126 = scmp.ne.s32.totalorder %s117, %s118
      %p127 = scmp.eq.s32.totalorder %s23, 0
      %p128 = por %p126, %p127
      %p129 = scmp.ne.s32.totalorder %s117, %s118
      %p130 = scmp.eq.s32.totalorder %s24, 1
      %p131 = por %p129, %p130
      %p133 = scmp.ne.s32.totalorder %s118, %s132
      %p134 = scmp.eq.s32.totalorder %s24, 0
      %p135 = por %p133, %p134
      %s136 = ssub.s32 %s18, %s25
      %p137 = scmp.eq.s32.totalorder %s136, 0
      %s139 = sadd.s32 %s138, 1
      %s140 = scalar_select %p137, %s138, %s139
      %p143 = pneg %p137
      %p144 = scmp.eq.s32.totalorder %s18, 1
      %p145 = por %p143, %p144
      %p146 = scmp.ne.s32.totalorder %s138, %s141
      %p147 = scmp.eq.s32.totalorder %s18, 0
      %p148 = por %p146, %p147
      %p149 = scmp.ne.s32.totalorder %s138, %s141
      %p150 = scmp.eq.s32.totalorder %s23, 1
      %p151 = por %p149, %p150
      %p152 = scmp.ne.s32.totalorder %s141, %s142
      %p153 = scmp.eq.s32.totalorder %s23, 0
      %p154 = por %p152, %p153
      %p155 = scmp.ne.s32.totalorder %s141, %s142
      %p156 = scmp.eq.s32.totalorder %s24, 1
      %p157 = por %p155, %p156
      %p159 = scmp.ne.s32.totalorder %s142, %s158
      %p160 = scmp.eq.s32.totalorder %s24, 0
      %p161 = por %p159, %p160
      %p162 = scmp.le.s32.totalorder 1, %s18
      %p163 = scmp.lt.s32.totalorder %s18, 3
      %p164 = pnand %p162, %p163
      %p165 = pneg %p164
      // Predicated region
      $region9: #{tpu_custom_call.1} parent=5 // pred_check
        _
      $region10: #{tpu_custom_call.1} parent=5 // pred_check_branch
        %167 = sbr.rel (%p164) target = $region12
      $region11: #{tpu_custom_call.1} parent=5 // pred_region
        %s168 = ssub.s32 %s18, 1
        // Predicated region
        $region13: #{tpu_custom_call.1} parent=11 // pred_check
          %p169 = pneg %p65
        $region14: #{tpu_custom_call.1} parent=11 // pred_check_branch
          %171 = sbr.rel (%p169) target = $region16
        $region15: #{tpu_custom_call.1} parent=11 // pred_region
          %173 = vsyncadd [#allocation6], 0
          %s174 = sshll.u32 %s1, 4
          %s175 = int_to_ptr.hbm [resolvable:$true] %s174
          %s176 = sshll.u32 [#allocation5], 4
          %s177 = int_to_ptr.vmem [resolvable:$true] %s176
          %182 = dma.hbm_to_vmem [thread:$0]  %s175, 512, %s177, [#allocation6], 128, 128, 8
        $region16: #{tpu_custom_call.1} parent=11 // pred_fallthru
          _
        // Predicated region
        $region17: #{tpu_custom_call.1} parent=11 // pred_check
          %p183 = pneg %p86
        $region18: #{tpu_custom_call.1} parent=11 // pred_check_branch
          %185 = sbr.rel (%p183) target = $region20
        $region19: #{tpu_custom_call.1} parent=11 // pred_region
          _
        $region20: #{tpu_custom_call.1} parent=11 // pred_fallthru
          _
        // Predicated region
        $region21: #{tpu_custom_call.1} parent=11 // pred_check
          %p186 = pneg %p107
        $region22: #{tpu_custom_call.1} parent=11 // pred_check_branch
          %188 = sbr.rel (%p186) target = $region24
        $region23: #{tpu_custom_call.1} parent=11 // pred_region
          %190 = vsyncadd [#allocation6], 0
          %s191 = sshll.u32 %s3, 4
          %s192 = int_to_ptr.hbm [resolvable:$true] %s191
          %s193 = sshll.u32 [#allocation7], 4
          %s194 = int_to_ptr.vmem [resolvable:$true] %s193
          %199 = dma.hbm_to_vmem [thread:$0]  %s192, 512, %s194, [#allocation6], 128, 128, 8
        $region24: #{tpu_custom_call.1} parent=11 // pred_fallthru
          _
        // Predicated region
        $region25: #{tpu_custom_call.1} parent=11 // pred_check
          %p200 = pneg %p128
        $region26: #{tpu_custom_call.1} parent=11 // pred_check_branch
          %202 = sbr.rel (%p200) target = $region28
        $region27: #{tpu_custom_call.1} parent=11 // pred_region
          _
        $region28: #{tpu_custom_call.1} parent=11 // pred_fallthru
          _
      $region12: #{tpu_custom_call.1} parent=5 // pred_fallthru
        _
      %p203 = scmp.lt.s32.totalorder %s18, 2
      // Predicated region
      $region29: #{tpu_custom_call.1} parent=5 // pred_check
        %p204 = pneg %p203
      $region30: #{tpu_custom_call.1} parent=5 // pred_check_branch
        %206 = sbr.rel (%p204) target = $region32
      $region31: #{tpu_custom_call.1} parent=5 // pred_region
        // Predicated region
        $region33: #{tpu_custom_call.1} parent=31 // pred_check
          %p207 = pneg %p38
        $region34: #{tpu_custom_call.1} parent=31 // pred_check_branch
          %209 = sbr.rel (%p207) target = $region36
        $region35: #{tpu_custom_call.1} parent=31 // pred_region
          %s210 = sand.u32 %s28, 1
          %s211 = scalar_lea.sflag [#allocation3], %s210
          %s212 = sand.u32 %s28, 1
          %s213 = smul.addr %s212, 8
          %s214 = scalar_lea.vmem [#allocation2], %s213
          %216 = vsyncadd %s211, 0
          %s217 = smul.addr %s18, 8
          %s218 = scalar_lea.hbm %s0, %s217
          %s220 = sshll.u32 %s218, 4
          %s221 = int_to_ptr.hbm [resolvable:$true] %s220
          %s222 = sshll.u32 %s214, 4
          %s223 = int_to_ptr.vmem [resolvable:$true] %s222
          %225 = dma.hbm_to_vmem [thread:$0]  %s221, 128, %s223, %s211
        $region36: #{tpu_custom_call.1} parent=31 // pred_fallthru
          _
      $region32: #{tpu_custom_call.1} parent=5 // pred_fallthru
        _
      %p226 = scmp.le.s32.totalorder 1, %s18
      %p227 = scmp.lt.s32.totalorder %s18, 3
      %p228 = pnand %p226, %p227
      %p229 = pneg %p228
      // Predicated region
      $region37: #{tpu_custom_call.1} parent=5 // pred_check
        _
      $region38: #{tpu_custom_call.1} parent=5 // pred_check_branch
        %231 = sbr.rel (%p228) target = $region40
      $region39: #{tpu_custom_call.1} parent=5 // pred_region
        %s232 = ssub.s32 %s18, 1
        %s233 = sand.u32 %s31, 1
        %s234 = scalar_lea.sflag [#allocation3], %s233
        %s235 = sand.u32 %s31, 1
        %s236 = smul.addr %s235, 8
        %s237 = scalar_lea.vmem [#allocation2], %s236
        // Predicated region
        $region41: #{tpu_custom_call.1} parent=39 // pred_check
          %p238 = pneg %p44
        $region42: #{tpu_custom_call.1} parent=39 // pred_check_branch
          %240 = sbr.rel (%p238) target = $region44
        $region43: #{tpu_custom_call.1} parent=39 // pred_region
          %242 = dma.done %s234, 128
        $region44: #{tpu_custom_call.1} parent=39 // pred_fallthru
          _
        // Predicated region
        $region45: #{tpu_custom_call.1} parent=39 // pred_check
          %p243 = pneg %p65
        $region46: #{tpu_custom_call.1} parent=39 // pred_check_branch
          %245 = sbr.rel (%p243) target = $region48
        $region47: #{tpu_custom_call.1} parent=39 // pred_region
          %247 = dma.done [#allocation6], 512
        $region48: #{tpu_custom_call.1} parent=39 // pred_fallthru
          _
        // Predicated region
        $region49: #{tpu_custom_call.1} parent=39 // pred_check
          %p248 = pneg %p107
        $region50: #{tpu_custom_call.1} parent=39 // pred_check_branch
          %250 = sbr.rel (%p248) target = $region52
        $region51: #{tpu_custom_call.1} parent=39 // pred_region
          %252 = dma.done [#allocation6], 512
        $region52: #{tpu_custom_call.1} parent=39 // pred_fallthru
          _
        %s253 = sand.u32 %s31, 1
        %s254 = scalar_lea.sflag [#allocation3], %s253
        %s255 = sand.u32 %s31, 1
        %s256 = smul.addr %s255, 8
        %s257 = scalar_lea.vmem [#allocation2], %s256
        %p258 = pneg %p44
        %p259 = pneg %p41
        %p260 = pneg %p65
        %p261 = pneg %p62
        %p262 = pneg %p86
        %p263 = pneg %p83
        %p264 = pneg %p107
        %p265 = pneg %p104
        %p266 = pneg %p128
        %p267 = pneg %p125
        %p268 = pneg %p154
        %p269 = pneg %p151
        %s270 = sand.u32 %s141, 1
        %s271 = scalar_lea.sflag [#allocation4], %s270
        %s272 = sand.u32 %s141, 1
        %s273 = smul.addr %s272, 8
        %s274 = scalar_lea.vmem [#allocation8], %s273
        %v275 = vld [vmem:[%s237] sm:$0xff]
        %v276 = vld [vmem:[#allocation5] sm:$0xff]
        %v277 = vld [vmem:[#allocation5 + $0x8] sm:$0xff]
        %v278 = vld [vmem:[#allocation5 + $0x10] sm:$0xff]
        %v279 = vld [vmem:[#allocation5 + $0x18] sm:$0xff]
        %v280 = vld [vmem:[%s2] sm:$0x1]
        %v282 = vperm.slane %v280, 0
        %vm284 = vcmask 261120
        %v286 = vsel %vm284, %v275, 0
        %288 = vmatpush.msra.mxu0 0.0
        %289 = vmatpush.msra.mxu0 0.0
        %290 = vmatpush.msra.mxu0 0.0
        %291 = vmatpush.msra.mxu0 0.0
        %292 = vmatpush.msra.mxu0 0.0
        %293 = vmatpush.msra.mxu0 0.0
        %294 = vmatpush.msra.mxu0 0.0
        %295 = vmatpush.msra.mxu0 0.0
        %296 = vmatpush.msra.mxu0 0.0
        %297 = vmatpush.msra.mxu0 0.0
        %298 = vmatpush.msra.mxu0 0.0
        %299 = vmatpush.msra.mxu0 0.0
        %300 = vmatpush.msra.mxu0 %v279
        %301 = vmatpush.msra.mxu0 %v278
        %302 = vmatpush.msra.mxu0 %v277
        %303 = vmatpush.msra.mxu0 %v276
        %304 = vmatmul.f32.gmra.mxu0 %v286
        %v305 = vpop.f32.mrf.mxu0
        %v306 = vadd.f32 %v282, %v305
        %307 = vdwg.mxu0
        %v308 = vmul.f32 %v306, 0.35355338
        %310 = vrot.lane.b32.xlu0 %v306, 96
        %v311 = vpop.permute.xlu0 %310
        %vm312 = vcmask 64512
        %v314 = vsel %vm312, %v308, 0
        %v316 = vsel %vm312, %v311, 0
        %318 = vmatpush.xpose.msra.mxu0 0.0
        %319 = vmatpush.xpose.msra.mxu0 0.0
        %320 = vmatpush.xpose.msra.mxu0 0.0
        %321 = vmatpush.xpose.msra.mxu0 0.0
        %322 = vmatpush.xpose.msra.mxu0 0.0
        %323 = vmatpush.xpose.msra.mxu0 0.0
        %324 = vmatpush.xpose.msra.mxu0 0.0
        %325 = vmatpush.xpose.msra.mxu0 0.0
        %326 = vmatpush.xpose.msra.mxu0 0.0
        %327 = vmatpush.xpose.msra.mxu0 0.0
        %328 = vmatpush.xpose.msra.mxu0 0.0
        %329 = vmatpush.xpose.msra.mxu0 0.0
        %330 = vmatpush.xpose.msra.mxu0 0.0
        %331 = vmatpush.xpose.msra.mxu0 0.0
        %332 = vmatpush.xpose.msra.mxu0 0.0
        %333 = vmatpush.xpose.msra.mxu0 %v316
        %334 = vmatmul.f32.gmra.mxu0 %v314
        %v335 = vpop.f32.mrf.mxu0
        %v336 = vadd.f32 0.0, %v335
        %337 = vdwg.mxu0
        %v338 = vsel %vm312, %v336, -inf
        %339 = vmax.xlane.f32.xlu0 %v338
        %v340 = vpop.xlane.xlu0 %339
        %v341 = vsub.f32 %v336, %v340
        %v342 = vmul.f32 %v341, 1.442695
        %v343 = vpow.pop %v342
        %v344 = vsel %vm312, %v343, 0.0
        %345 = vadd.xlane.f32.xlu0 %v344
        %v346 = vpop.xlane.xlu0 %345
        %v347 = vrcp.pop %v346
        %v348 = vmul.f32 %v346, %v347
        %v349 = vsub.f32 1.0, %v348
        %v350 = vmul.f32 %v347, %v349
        %v351 = vadd.f32 %v347, %v350
        %vm352 = vweird.f32 %v346
        %vm353 = vweird.f32 %v347
        %vm354 = vmor %vm352, %vm353
        %v355 = vsel %vm354, %v347, %v351
        %v356 = vand.u32 2147483647, %v346
        %vm357 = vcmp.eq.f32.partialorder %v356, 8.507059e+37
        %v358 = vand.u32 %v346, 2147483648
        %v359 = vor.u32 1.1754944e-38, %v358
        %v360 = vsel %vm357, %v359, %v355
        %v361 = vmul.f32 %v343, %v360
        %362 = vrot.lane.b32.xlu0 %v306, 64
        %v363 = vpop.permute.xlu0 %362
        %v366 = vsel %vm312, %v361, 0
        %368 = vmatpush.msra.mxu0 0.0
        %369 = vmatpush.msra.mxu0 0.0
        %370 = vmatpush.msra.mxu0 0.0
        %371 = vmatpush.msra.mxu0 0.0
        %372 = vmatpush.msra.mxu0 0.0
        %373 = vmatpush.msra.mxu0 0.0
        %374 = vmatpush.msra.mxu0 0.0
        %375 = vmatpush.msra.mxu0 0.0
        %376 = vmatpush.msra.mxu0 0.0
        %377 = vmatpush.msra.mxu0 0.0
        %378 = vmatpush.msra.mxu0 0.0
        %379 = vmatpush.msra.mxu0 0.0
        %380 = vmatpush.msra.mxu0 0.0
        %381 = vmatpush.msra.mxu0 0.0
        %382 = vmatpush.msra.mxu0 0.0
        %383 = vmatpush.msra.mxu0 %v363
        %384 = vmatmul.f32.gmra.mxu0 %v366
        %v385 = vpop.f32.mrf.mxu0
        %v386 = vadd.f32 0.0, %v385
        %387 = vdwg.mxu0
        %v388 = vld [vmem:[#allocation7] sm:$0xff]
        %389 = vrot.lane.b32.xlu0 %v308, 120
        %v390 = vpop.permute.xlu0 %389
        %391 = vrot.lane.b32.xlu0 %v306, 88
        %v392 = vpop.permute.xlu0 %391
        %v393 = vsel %vm312, %v390, 0
        %v395 = vsel %vm312, %v392, 0
        %397 = vmatpush.xpose.msra.mxu0 0.0
        %398 = vmatpush.xpose.msra.mxu0 0.0
        %399 = vmatpush.xpose.msra.mxu0 0.0
        %400 = vmatpush.xpose.msra.mxu0 0.0
        %401 = vmatpush.xpose.msra.mxu0 0.0
        %402 = vmatpush.xpose.msra.mxu0 0.0
        %403 = vmatpush.xpose.msra.mxu0 0.0
        %404 = vmatpush.xpose.msra.mxu0 0.0
        %405 = vmatpush.xpose.msra.mxu0 0.0
        %406 = vmatpush.xpose.msra.mxu0 0.0
        %407 = vmatpush.xpose.msra.mxu0 0.0
        %408 = vmatpush.xpose.msra.mxu0 0.0
        %409 = vmatpush.xpose.msra.mxu0 0.0
        %410 = vmatpush.xpose.msra.mxu0 0.0
        %411 = vmatpush.xpose.msra.mxu0 0.0
        %412 = vmatpush.xpose.msra.mxu0 %v395
        %413 = vmatmul.f32.gmra.mxu0 %v393
        %v414 = vpop.f32.mrf.mxu0
        %v415 = vadd.f32 0.0, %v414
        %416 = vdwg.mxu0
        %v417 = vsel %vm312, %v415, -inf
        %418 = vmax.xlane.f32.xlu0 %v417
        %v419 = vpop.xlane.xlu0 %418
        %v420 = vsub.f32 %v415, %v419
        %v421 = vmul.f32 %v420, 1.442695
        %v422 = vpow.pop %v421
        %v423 = vsel %vm312, %v422, 0.0
        %424 = vadd.xlane.f32.xlu0 %v423
        %v425 = vpop.xlane.xlu0 %424
        %v426 = vrcp.pop %v425
        %v427 = vmul.f32 %v425, %v426
        %v428 = vsub.f32 1.0, %v427
        %v429 = vmul.f32 %v426, %v428
        %v430 = vadd.f32 %v426, %v429
        %vm431 = vweird.f32 %v425
        %vm432 = vweird.f32 %v426
        %vm433 = vmor %vm431, %vm432
        %v434 = vsel %vm433, %v426, %v430
        %v435 = vand.u32 2147483647, %v425
        %vm436 = vcmp.eq.f32.partialorder %v435, 8.507059e+37
        %v437 = vand.u32 %v425, 2147483648
        %v438 = vor.u32 1.1754944e-38, %v437
        %v439 = vsel %vm436, %v438, %v434
        %v440 = vmul.f32 %v422, %v439
        %441 = vrot.lane.b32.xlu0 %v306, 56
        %v442 = vpop.permute.xlu0 %441
        %v445 = vsel %vm312, %v440, 0
        %447 = vmatpush.msra.mxu0 0.0
        %448 = vmatpush.msra.mxu0 0.0
        %449 = vmatpush.msra.mxu0 0.0
        %450 = vmatpush.msra.mxu0 0.0
        %451 = vmatpush.msra.mxu0 0.0
        %452 = vmatpush.msra.mxu0 0.0
        %453 = vmatpush.msra.mxu0 0.0
        %454 = vmatpush.msra.mxu0 0.0
        %455 = vmatpush.msra.mxu0 0.0
        %456 = vmatpush.msra.mxu0 0.0
        %457 = vmatpush.msra.mxu0 0.0
        %458 = vmatpush.msra.mxu0 0.0
        %459 = vmatpush.msra.mxu0 0.0
        %460 = vmatpush.msra.mxu0 0.0
        %461 = vmatpush.msra.mxu0 0.0
        %462 = vmatpush.msra.mxu0 %v442
        %463 = vmatmul.f32.gmra.mxu0 %v445
        %v464 = vpop.f32.mrf.mxu0
        %v465 = vadd.f32 0.0, %v464
        %466 = vdwg.mxu0
        %v467 = vld [vmem:[#allocation7 + $0x8] sm:$0xff]
        %v469 = vsel %vm312, %v465, 0
        %471 = vmatpush.msra.mxu0 0.0
        %472 = vmatpush.msra.mxu0 0.0
        %473 = vmatpush.msra.mxu0 0.0
        %474 = vmatpush.msra.mxu0 0.0
        %475 = vmatpush.msra.mxu0 0.0
        %476 = vmatpush.msra.mxu0 0.0
        %477 = vmatpush.msra.mxu0 0.0
        %478 = vmatpush.msra.mxu0 0.0
        %479 = vmatpush.msra.mxu0 0.0
        %480 = vmatpush.msra.mxu0 0.0
        %481 = vmatpush.msra.mxu0 0.0
        %482 = vmatpush.msra.mxu0 0.0
        %483 = vmatpush.msra.mxu0 0.0
        %484 = vmatpush.msra.mxu0 0.0
        %485 = vmatpush.msra.mxu0 0.0
        %486 = vmatpush.msra.mxu0 %v467
        %487 = vmatmul.f32.gmra.mxu0 %v469
        %v488 = vpop.f32.mrf.mxu0
        %v489 = vadd.f32 0.0, %v488
        %490 = vdwg.mxu0
        %v492 = vsel %vm312, %v386, 0
        %494 = vmatpush.msra.mxu0 0.0
        %495 = vmatpush.msra.mxu0 0.0
        %496 = vmatpush.msra.mxu0 0.0
        %497 = vmatpush.msra.mxu0 0.0
        %498 = vmatpush.msra.mxu0 0.0
        %499 = vmatpush.msra.mxu0 0.0
        %500 = vmatpush.msra.mxu0 0.0
        %501 = vmatpush.msra.mxu0 0.0
        %502 = vmatpush.msra.mxu0 0.0
        %503 = vmatpush.msra.mxu0 0.0
        %504 = vmatpush.msra.mxu0 0.0
        %505 = vmatpush.msra.mxu0 0.0
        %506 = vmatpush.msra.mxu0 0.0
        %507 = vmatpush.msra.mxu0 0.0
        %508 = vmatpush.msra.mxu0 0.0
        %509 = vmatpush.msra.mxu0 %v388
        %510 = vmatmul.f32.gmra.mxu0 %v492
        %v511 = vpop.f32.mrf.mxu0
        %v512 = vadd.f32 %v489, %v511
        %513 = vdwg.mxu0
        %514 = vrot.lane.b32.xlu0 %v308, 112
        %v515 = vpop.permute.xlu0 %514
        %516 = vrot.lane.b32.xlu0 %v306, 80
        %v517 = vpop.permute.xlu0 %516
        %v518 = vsel %vm312, %v515, 0
        %v520 = vsel %vm312, %v517, 0
        %522 = vmatpush.xpose.msra.mxu0 0.0
        %523 = vmatpush.xpose.msra.mxu0 0.0
        %524 = vmatpush.xpose.msra.mxu0 0.0
        %525 = vmatpush.xpose.msra.mxu0 0.0
        %526 = vmatpush.xpose.msra.mxu0 0.0
        %527 = vmatpush.xpose.msra.mxu0 0.0
        %528 = vmatpush.xpose.msra.mxu0 0.0
        %529 = vmatpush.xpose.msra.mxu0 0.0
        %530 = vmatpush.xpose.msra.mxu0 0.0
        %531 = vmatpush.xpose.msra.mxu0 0.0
        %532 = vmatpush.xpose.msra.mxu0 0.0
        %533 = vmatpush.xpose.msra.mxu0 0.0
        %534 = vmatpush.xpose.msra.mxu0 0.0
        %535 = vmatpush.xpose.msra.mxu0 0.0
        %536 = vmatpush.xpose.msra.mxu0 0.0
        %537 = vmatpush.xpose.msra.mxu0 %v520
        %538 = vmatmul.f32.gmra.mxu0 %v518
        %v539 = vpop.f32.mrf.mxu0
        %v540 = vadd.f32 0.0, %v539
        %541 = vdwg.mxu0
        %v542 = vsel %vm312, %v540, -inf
        %543 = vmax.xlane.f32.xlu0 %v542
        %v544 = vpop.xlane.xlu0 %543
        %v545 = vsub.f32 %v540, %v544
        %v546 = vmul.f32 %v545, 1.442695
        %v547 = vpow.pop %v546
        %v548 = vsel %vm312, %v547, 0.0
        %549 = vadd.xlane.f32.xlu0 %v548
        %v550 = vpop.xlane.xlu0 %549
        %v551 = vrcp.pop %v550
        %v552 = vmul.f32 %v550, %v551
        %v553 = vsub.f32 1.0, %v552
        %v554 = vmul.f32 %v551, %v553
        %v555 = vadd.f32 %v551, %v554
        %vm556 = vweird.f32 %v550
        %vm557 = vweird.f32 %v551
        %vm558 = vmor %vm556, %vm557
        %v559 = vsel %vm558, %v551, %v555
        %v560 = vand.u32 2147483647, %v550
        %vm561 = vcmp.eq.f32.partialorder %v560, 8.507059e+37
        %v562 = vand.u32 %v550, 2147483648
        %v563 = vor.u32 1.1754944e-38, %v562
        %v564 = vsel %vm561, %v563, %v559
        %v565 = vmul.f32 %v547, %v564
        %566 = vrot.lane.b32.xlu0 %v306, 48
        %v567 = vpop.permute.xlu0 %566
        %v570 = vsel %vm312, %v565, 0
        %572 = vmatpush.msra.mxu0 0.0
        %573 = vmatpush.msra.mxu0 0.0
        %574 = vmatpush.msra.mxu0 0.0
        %575 = vmatpush.msra.mxu0 0.0
        %576 = vmatpush.msra.mxu0 0.0
        %577 = vmatpush.msra.mxu0 0.0
        %578 = vmatpush.msra.mxu0 0.0
        %579 = vmatpush.msra.mxu0 0.0
        %580 = vmatpush.msra.mxu0 0.0
        %581 = vmatpush.msra.mxu0 0.0
        %582 = vmatpush.msra.mxu0 0.0
        %583 = vmatpush.msra.mxu0 0.0
        %584 = vmatpush.msra.mxu0 0.0
        %585 = vmatpush.msra.mxu0 0.0
        %586 = vmatpush.msra.mxu0 0.0
        %587 = vmatpush.msra.mxu0 %v567
        %588 = vmatmul.f32.gmra.mxu0 %v570
        %v589 = vpop.f32.mrf.mxu0
        %v590 = vadd.f32 0.0, %v589
        %591 = vdwg.mxu0
        %v592 = vld [vmem:[#allocation7 + $0x10] sm:$0xff]
        %v594 = vsel %vm312, %v590, 0
        %596 = vmatpush.msra.mxu0 0.0
        %597 = vmatpush.msra.mxu0 0.0
        %598 = vmatpush.msra.mxu0 0.0
        %599 = vmatpush.msra.mxu0 0.0
        %600 = vmatpush.msra.mxu0 0.0
        %601 = vmatpush.msra.mxu0 0.0
        %602 = vmatpush.msra.mxu0 0.0
        %603 = vmatpush.msra.mxu0 0.0
        %604 = vmatpush.msra.mxu0 0.0
        %605 = vmatpush.msra.mxu0 0.0
        %606 = vmatpush.msra.mxu0 0.0
        %607 = vmatpush.msra.mxu0 0.0
        %608 = vmatpush.msra.mxu0 0.0
        %609 = vmatpush.msra.mxu0 0.0
        %610 = vmatpush.msra.mxu0 0.0
        %611 = vmatpush.msra.mxu0 %v592
        %612 = vmatmul.f32.gmra.mxu0 %v594
        %v613 = vpop.f32.mrf.mxu0
        %v614 = vadd.f32 0.0, %v613
        %615 = vdwg.mxu0
        %v616 = vadd.f32 %v512, %v614
        %617 = vrot.lane.b32.xlu0 %v308, 104
        %v618 = vpop.permute.xlu0 %617
        %619 = vrot.lane.b32.xlu0 %v306, 72
        %v620 = vpop.permute.xlu0 %619
        %v621 = vsel %vm312, %v618, 0
        %v623 = vsel %vm312, %v620, 0
        %625 = vmatpush.xpose.msra.mxu0 0.0
        %626 = vmatpush.xpose.msra.mxu0 0.0
        %627 = vmatpush.xpose.msra.mxu0 0.0
        %628 = vmatpush.xpose.msra.mxu0 0.0
        %629 = vmatpush.xpose.msra.mxu0 0.0
        %630 = vmatpush.xpose.msra.mxu0 0.0
        %631 = vmatpush.xpose.msra.mxu0 0.0
        %632 = vmatpush.xpose.msra.mxu0 0.0
        %633 = vmatpush.xpose.msra.mxu0 0.0
        %634 = vmatpush.xpose.msra.mxu0 0.0
        %635 = vmatpush.xpose.msra.mxu0 0.0
        %636 = vmatpush.xpose.msra.mxu0 0.0
        %637 = vmatpush.xpose.msra.mxu0 0.0
        %638 = vmatpush.xpose.msra.mxu0 0.0
        %639 = vmatpush.xpose.msra.mxu0 0.0
        %640 = vmatpush.xpose.msra.mxu0 %v623
        %641 = vmatmul.f32.gmra.mxu0 %v621
        %v642 = vpop.f32.mrf.mxu0
        %v643 = vadd.f32 0.0, %v642
        %644 = vdwg.mxu0
        %v645 = vsel %vm312, %v643, -inf
        %646 = vmax.xlane.f32.xlu0 %v645
        %v647 = vpop.xlane.xlu0 %646
        %v648 = vsub.f32 %v643, %v647
        %v649 = vmul.f32 %v648, 1.442695
        %v650 = vpow.pop %v649
        %v651 = vsel %vm312, %v650, 0.0
        %652 = vadd.xlane.f32.xlu0 %v651
        %v653 = vpop.xlane.xlu0 %652
        %v654 = vrcp.pop %v653
        %v655 = vmul.f32 %v653, %v654
        %v656 = vsub.f32 1.0, %v655
        %v657 = vmul.f32 %v654, %v656
        %v658 = vadd.f32 %v654, %v657
        %vm659 = vweird.f32 %v653
        %vm660 = vweird.f32 %v654
        %vm661 = vmor %vm659, %vm660
        %v662 = vsel %vm661, %v654, %v658
        %v663 = vand.u32 2147483647, %v653
        %vm664 = vcmp.eq.f32.partialorder %v663, 8.507059e+37
        %v665 = vand.u32 %v653, 2147483648
        %v666 = vor.u32 1.1754944e-38, %v665
        %v667 = vsel %vm664, %v666, %v662
        %v668 = vmul.f32 %v650, %v667
        %669 = vrot.lane.b32.xlu0 %v306, 40
        %v670 = vpop.permute.xlu0 %669
        %v673 = vsel %vm312, %v668, 0
        %675 = vmatpush.msra.mxu0 0.0
        %676 = vmatpush.msra.mxu0 0.0
        %677 = vmatpush.msra.mxu0 0.0
        %678 = vmatpush.msra.mxu0 0.0
        %679 = vmatpush.msra.mxu0 0.0
        %680 = vmatpush.msra.mxu0 0.0
        %681 = vmatpush.msra.mxu0 0.0
        %682 = vmatpush.msra.mxu0 0.0
        %683 = vmatpush.msra.mxu0 0.0
        %684 = vmatpush.msra.mxu0 0.0
        %685 = vmatpush.msra.mxu0 0.0
        %686 = vmatpush.msra.mxu0 0.0
        %687 = vmatpush.msra.mxu0 0.0
        %688 = vmatpush.msra.mxu0 0.0
        %689 = vmatpush.msra.mxu0 0.0
        %690 = vmatpush.msra.mxu0 %v670
        %691 = vmatmul.f32.gmra.mxu0 %v673
        %v692 = vpop.f32.mrf.mxu0
        %v693 = vadd.f32 0.0, %v692
        %694 = vdwg.mxu0
        %v695 = vld [vmem:[#allocation7 + $0x18] sm:$0xff]
        %v697 = vsel %vm312, %v693, 0
        %699 = vmatpush.msra.mxu0 0.0
        %700 = vmatpush.msra.mxu0 0.0
        %701 = vmatpush.msra.mxu0 0.0
        %702 = vmatpush.msra.mxu0 0.0
        %703 = vmatpush.msra.mxu0 0.0
        %704 = vmatpush.msra.mxu0 0.0
        %705 = vmatpush.msra.mxu0 0.0
        %706 = vmatpush.msra.mxu0 0.0
        %707 = vmatpush.msra.mxu0 0.0
        %708 = vmatpush.msra.mxu0 0.0
        %709 = vmatpush.msra.mxu0 0.0
        %710 = vmatpush.msra.mxu0 0.0
        %711 = vmatpush.msra.mxu0 0.0
        %712 = vmatpush.msra.mxu0 0.0
        %713 = vmatpush.msra.mxu0 0.0
        %714 = vmatpush.msra.mxu0 %v695
        %715 = vmatmul.f32.gmra.mxu0 %v697
        %v716 = vpop.f32.mrf.mxu0
        %v717 = vadd.f32 0.0, %v716
        %718 = vdwg.mxu0
        %v719 = vadd.f32 %v616, %v717
        %v720 = vld [vmem:[%s4] sm:$0x1]
        %v722 = vperm.slane %v720, 0
        %v724 = vadd.f32 %v719, %v722
        %725 = vst.msk [vmem:[%s274] sm:$0xff] %vm284, %v724
        %s726 = sand.u32 %s141, 1
        %s727 = scalar_lea.sflag [#allocation4], %s726
        %s728 = sand.u32 %s141, 1
        %s729 = smul.addr %s728, 8
        %s730 = scalar_lea.vmem [#allocation8], %s729
        // Predicated region
        $region53: #{tpu_custom_call.1} parent=39 // pred_check
          %p731 = pneg %p151
        $region54: #{tpu_custom_call.1} parent=39 // pred_check_branch
          %733 = sbr.rel (%p731) target = $region56
        $region55: #{tpu_custom_call.1} parent=39 // pred_region
          %735 = vsyncadd %s727, 0
          %s736 = smul.addr %s23, 8
          %s737 = scalar_lea.hbm %s5, %s736
          %s739 = sshll.u32 %s730, 4
          %s740 = int_to_ptr.vmem [resolvable:$true] %s739
          %s741 = sshll.u32 %s737, 4
          %s742 = int_to_ptr.hbm [resolvable:$true] %s741
          %744 = dma.vmem_to_hbm [thread:$0]  %s740, 128, %s742, %s727
        $region56: #{tpu_custom_call.1} parent=39 // pred_fallthru
          _
      $region40: #{tpu_custom_call.1} parent=5 // pred_fallthru
        _
      %p745 = scmp.le.s32.totalorder 2, %s18
      // Predicated region
      $region57: #{tpu_custom_call.1} parent=5 // pred_check
        %p746 = pneg %p745
      $region58: #{tpu_custom_call.1} parent=5 // pred_check_branch
        %748 = sbr.rel (%p746) target = $region60
      $region59: #{tpu_custom_call.1} parent=5 // pred_region
        %s749 = ssub.s32 %s18, 2
        // Predicated region
        $region61: #{tpu_custom_call.1} parent=59 // pred_check
          %p750 = pneg %p157
        $region62: #{tpu_custom_call.1} parent=59 // pred_check_branch
          %752 = sbr.rel (%p750) target = $region64
        $region63: #{tpu_custom_call.1} parent=59 // pred_region
          %s753 = sand.u32 %s142, 1
          %s754 = scalar_lea.sflag [#allocation4], %s753
          %s755 = sand.u32 %s142, 1
          %s756 = smul.addr %s755, 8
          %s757 = scalar_lea.vmem [#allocation8], %s756
          %759 = dma.done %s754, 128
        $region64: #{tpu_custom_call.1} parent=59 // pred_fallthru
          _
      $region60: #{tpu_custom_call.1} parent=5 // pred_fallthru
        _
    $region6: #{tpu_custom_call.1} parent=1 // loop_footer
      %s22 = sadd.s32 1, %s18
    $region7: #{tpu_custom_call.1} parent=1 // loop_footer_branch
      %17 = sbr.rel target = $region3
    $region8: #{tpu_custom_call.1} parent=1 // loop_exit
      _
    %760 = vsyncpa [#allocation3], 1
    %s761 = scalar_lea.sflag [#allocation3], 1
    %762 = vsyncpa %s761, 1
    %763 = vsyncpa [#allocation6], 1
    %764 = vsyncpa [#allocation4], 1
    %s765 = scalar_lea.sflag [#allocation4], 1
    %766 = vsyncpa %s765, 1

</llo_original>
